<compile_context>
chip_gen: v6e
topology: v6e:2x2x1
jax: 0.10.0
libtpu: 0.0.40
codegen_flags: <defaults>
</compile_context>

<pallas_src>
import functools

import jax
import jax.numpy as jnp
from jax.experimental import pallas as pl
from jax.experimental.pallas import tpu as pltpu


def _attention_kernel(hproj_ref, e_ref, we_ref, v_ref, m_ref, o_ref, *,
                      num_s_tiles):
    """Grid step (i, j): batch tile i, src-len chunk j.

    hproj_ref: (TB, H)      f32        hidden @ W_h + b (hoisted to wrapper)
    e_ref:     (TS, TB, H)  f32/bf16   encoder outputs, original [S, B, H] layout
    we_ref:    (H, H)       bf16/f32   encoder half of attn weight (in-dim major)
    v_ref:     (1, H)       f32        v weight (no bias)
    m_ref:     (TB, S)      f32        attention mask (0 => masked out)
    o_ref:     (TB, S)      f32        resident across j; softmax written at last j
    """
    ts, tb, H = e_ref.shape

    # Collapse (TS, TB) into the MXU M dimension.  tile_b is a multiple of the
    # encoder dtype's sublane packing, so this reshape is a pure re-indexing of
    # the (8,128)-tiled layout (no VMEM relayout copy).  The cast to the MXU
    # operand dtype happens here, in-kernel, so HBM only holds the original
    # dtype (no wrapper-side astype pass over the largest tensor).
    e2 = e_ref[...].reshape(ts * tb, H)
    e_proj = jnp.dot(e2.astype(we_ref.dtype), we_ref[...],
                     preferred_element_type=jnp.float32)
    e_proj = e_proj.reshape(ts, tb, H)

    # energy = tanh(hidden_proj + encoder_proj); elementwise math stays f32
    # (v5e has no bf16 VPU/EUP path).
    energy = jnp.tanh(e_proj + hproj_ref[...][None, :, :])          # (TS, TB, H)

    # v contraction on the VPU + lane reduce (no M=1 MXU pass), then lane-dense.
    scores = jnp.sum(energy * v_ref[...].reshape(1, 1, H), axis=-1)  # (TS, TB)
    scores = scores.T                                                # (TB, TS)

    def _finalize(att):
        # masked_fill(mask == 0, -1e6).  jnp.where (not bias-add) so garbage in
        # padded / out-of-bounds edge rows cannot leak NaN/Inf into valid rows.
        att = jnp.where(m_ref[...] == 0.0, -1000000.0, att)
        att = att - jnp.max(att, axis=-1, keepdims=True)
        p = jnp.exp(att)
        denom = jnp.sum(p, axis=-1, keepdims=True)
        # EUP approx reciprocal: rows sum to 1 to ~1e-3/1e-4 (documented).
        o_ref[...] = p * pl.reciprocal(denom, approx=True)

    if num_s_tiles == 1:
        # Single S chunk: finalize directly from registers (demo path).
        _finalize(scores)
    else:
        # Stash raw scores for this S chunk into the resident output block.
        # For best store efficiency pick tile_s as a multiple of 128 when S is
        # large; small/unaligned chunks fall back to masked VMEM stores.
        j = pl.program_id(1)
        col0 = pl.multiple_of(j * ts, ts)
        o_ref[:, pl.ds(col0, ts)] = scores

        @pl.when(j == num_s_tiles - 1)
        def _():
            _finalize(o_ref[...])


def _round_up(x, m):
    return ((x + m - 1) // m) * m


def _vmem_limit_bytes():
    """Per-generation VMEM limit with ~25% headroom (64 MiB v7x, 128 MiB v5e/v6e)."""
    cap = 64 * 1024 * 1024
    try:
        info = pltpu.get_tpu_info()
        cap = int(getattr(info, "vmem_capacity_bytes", cap))
    except Exception:
        pass
    return max(32 * 1024 * 1024, int(cap * 0.75))


def _choose_tile_s(S, cap=256):
    """Src-len chunk: full S when small, else a lane-aligned divisor of S."""
    if S <= cap:
        return S
    for cand in range(cap - cap % 128, 127, -128):
        if S % cand == 0:
            return cand
    return S  # fall back to no S-tiling rather than padding S


def _choose_tile_b(B, tile_s, H, enc_bytes, budget_bytes, packing, max_tile_b=256):
    """Largest packing-aligned batch tile fitting the VMEM budget, >=2 tiles."""
    if B <= packing:
        return B  # full-batch block (block dim == array dim is always legal)

    def working_set(tb):
        enc_slab = 2 * tile_s * tb * H * enc_bytes   # double-buffered input slab
        temps = 2 * tile_s * tb * H * 4              # f32 e_proj + energy temporaries
        return enc_slab + temps

    tb = min(max_tile_b, _round_up(B, packing))
    tb = max(packing, (tb // packing) * packing)
    while tb > packing and working_set(tb) > budget_bytes:
        tb -= packing
    # Keep >= 2 batch tiles so the "parallel" axis can feed both v7x TensorCores.
    if pl.cdiv(B, tb) < 2 and tb > packing:
        tb = max(packing, ((tb // 2) // packing) * packing)
    return tb


def attention_pallas(hidden, encoder_outputs, attn_mask, attn_w, attn_b, v_w,
                     *, tile_b=None, tile_s=None, matmul_dtype=jnp.bfloat16,
                     single_buffer_weights=False, enc_buffers=None):
    """hidden: [1, B, H], encoder_outputs: [S, B, H], attn_mask: [B, S].

    attn_w: [H, 2H] (torch nn.Linear weight), attn_b: [H], v_w: [1, H].
    Returns [B, S] float32.

    single_buffer_weights: set True on v7x to request Buffered(1) on the
      invariant (H, H) weight (saves H*H*2 bytes of 64 MiB VMEM for large H).
    enc_buffers: set 3 on v5e/v6e if the strided [S,B,H] fetch shows exposed DMA.
    """
    _, B, H = hidden.shape
    S = encoder_outputs.shape[0]
    enc_bytes = jnp.dtype(encoder_outputs.dtype).itemsize
    packing = max(8, 32 // max(1, enc_bytes))        # sublane packing of enc in VMEM

    vmem_limit = _vmem_limit_bytes()
    if tile_s is None:
        tile_s = _choose_tile_s(S)
    assert S % tile_s == 0, "tile_s must divide S"
    if tile_b is None:
        tile_b = _choose_tile_b(B, tile_s, H, enc_bytes,
                                budget_bytes=vmem_limit // 2, packing=packing)
    assert tile_b == B or tile_b % packing == 0, (
        "tile_b must equal B or be a multiple of the encoder sublane packing")

    num_b_tiles = pl.cdiv(B, tile_b)
    num_s_tiles = S // tile_s
    b_pad = num_b_tiles * tile_b

    # Split the attn weight in the wrapper (no in-kernel slicing / relayout).
    w_t = jnp.transpose(attn_w)                       # [2H, H], in-dim major
    w_h = w_t[:H, :].astype(jnp.float32)              # hidden half
    w_e = w_t[H:, :].astype(matmul_dtype)             # encoder half (MXU operand)

    # Hidden projection (+bias) hoisted: one small XLA matmul over the batch.
    h_proj = (hidden[0].astype(jnp.float32) @ w_h
              + attn_b.astype(jnp.float32)[None, :])  # [B, H] f32

    mask = attn_mask.astype(jnp.float32)              # [B, S]
    v2 = v_w.astype(jnp.float32).reshape(1, H)        # [1, H]

    # Only the tiny per-batch tensors are padded; the encoder stays un-padded
    # and un-cast in HBM.  A ragged last batch tile becomes a Pallas edge block
    # whose out-of-bounds rows are fully masked (mask=0) and sliced off below.
    if b_pad != B:
        pad = b_pad - B
        h_proj = jnp.pad(h_proj, ((0, pad), (0, 0)))
        mask = jnp.pad(mask, ((0, pad), (0, 0)))

    weight_mode = dict(pipeline_mode=pl.Buffered(1)) if single_buffer_weights else {}
    enc_mode = dict(pipeline_mode=pl.Buffered(enc_buffers)) if enc_buffers else {}

    kernel = functools.partial(_attention_kernel, num_s_tiles=num_s_tiles)

    out = pl.pallas_call(
        kernel,
        out_shape=jax.ShapeDtypeStruct((b_pad, S), jnp.float32),
        grid_spec=pltpu.PrefetchScalarGridSpec(
            num_scalar_prefetch=0,
            grid=(num_b_tiles, num_s_tiles),
            in_specs=[
                pl.BlockSpec((tile_b, H), lambda i, j: (i, 0)),            # h_proj
                pl.BlockSpec((tile_s, tile_b, H),
                             lambda i, j: (j, i, 0), **enc_mode),          # enc [S,B,H]
                pl.BlockSpec((H, H), lambda i, j: (0, 0), **weight_mode),  # W_e
                pl.BlockSpec((1, H), lambda i, j: (0, 0), **weight_mode),  # v
                pl.BlockSpec((tile_b, S), lambda i, j: (i, 0)),            # mask
            ],
            out_specs=pl.BlockSpec((tile_b, S), lambda i, j: (i, 0)),
        ),
        compiler_params=pltpu.CompilerParams(
            dimension_semantics=("parallel", "arbitrary"),
            vmem_limit_bytes=int(vmem_limit)),
    )(h_proj, encoder_outputs, w_e, v2, mask)

    return out[:B]


def attention_reference(hidden, encoder_outputs, attn_mask, attn_w, attn_b, v_w):
    """Pure-JAX reference mirroring the PyTorch forward exactly (all f32)."""
    S = encoder_outputs.shape[0]
    h = jnp.repeat(hidden, S, axis=0)                  # [S, B, H]
    h = jnp.transpose(h, (1, 0, 2))                    # [B, S, H]
    e = jnp.transpose(encoder_outputs, (1, 0, 2))      # [B, S, H]
    cat = jnp.concatenate([h, e], axis=2)              # [B, S, 2H]
    energy = jnp.tanh(cat @ attn_w.T + attn_b)         # [B, S, H]
    att = (energy @ v_w.T)[..., 0]                     # [B, S]
    att = jnp.where(attn_mask == 0, -1000000.0, att)
    return jax.nn.softmax(att, axis=1)


def _check(B, S, H, key):
    k_h, k_e, k_m, k_w, k_b, k_v = jax.random.split(key, 6)

    hidden = jax.random.normal(k_h, (1, B, H), dtype=jnp.float32)
    encoder_outputs = jax.random.normal(k_e, (S, B, H), dtype=jnp.float32)
    attn_mask = (jax.random.uniform(k_m, (B, S)) > 0.3).astype(jnp.float32)
    attn_mask = attn_mask.at[:, 0].set(1.0)  # ensure at least one valid position

    # Deterministic parameter init (mimicking nn.Linear uniform init).
    lim1 = 1.0 / jnp.sqrt(2.0 * H)
    attn_w = jax.random.uniform(k_w, (H, 2 * H), minval=-lim1, maxval=lim1, dtype=jnp.float32)
    attn_b = jax.random.uniform(k_b, (H,), minval=-lim1, maxval=lim1, dtype=jnp.float32)
    lim2 = 1.0 / jnp.sqrt(float(H))
    v_w = jax.random.uniform(k_v, (1, H), minval=-lim2, maxval=lim2, dtype=jnp.float32)

    out = attention_pallas(hidden, encoder_outputs, attn_mask, attn_w, attn_b, v_w)
    out = jax.block_until_ready(out)
    ref = attention_reference(hidden, encoder_outputs, attn_mask, attn_w, attn_b, v_w)

    assert out.shape == (B, S)
    # bf16 MXU operands + approx reciprocal -> loose-ish tolerance vs f32 ref.
    assert jnp.allclose(out, ref, atol=1e-2, rtol=1e-2), (out, ref)
    assert jnp.allclose(jnp.sum(out, axis=1), jnp.ones((B,)), atol=1e-2)


if __name__ == "__main__":
    key = jax.random.PRNGKey(0)
    k1, k2, k3 = jax.random.split(key, 3)
    _check(B=16, S=8, H=32, key=k1)   # 2 batch tiles of 8 (feeds both TCs on v7x)
    _check(B=3, S=8, H=32, key=k2)    # tiny batch: single full-dim block, no padding
    _check(B=12, S=8, H=32, key=k3)   # ragged batch: un-padded encoder, edge block
    print("KERNEL_OK")
</pallas_src>

<mosaic_0001>
module attributes {stable_mosaic.version = 11 : i64} {
  func.func @_attention_kernel(%arg0: i32, %arg1: i32, %arg2: memref<8x32xf32, #tpu.memory_space<vmem>>, %arg3: memref<8x8x32xf32, #tpu.memory_space<vmem>>, %arg4: memref<32x32xbf16, #tpu.memory_space<vmem>>, %arg5: memref<1x32xf32, #tpu.memory_space<vmem>>, %arg6: memref<8x8xf32, #tpu.memory_space<vmem>>, %arg7: memref<8x8xf32, #tpu.memory_space<vmem>>) attributes {dimension_semantics = [#tpu.dimension_semantics<parallel>, #tpu.dimension_semantics<arbitrary>], iteration_bounds = array<i64: 2, 1>, scalar_prefetch = 0 : i64, scratch_operands = 0 : i64, tpu.core_type = #tpu.core_type<tc>, window_params = [{transform_indices = @transform_0, window_bounds = array<i64: 8, 32>}, {transform_indices = @transform_1, window_bounds = array<i64: 8, 8, 32>}, {pipeline_mode = #tpu.pipeline_mode<synchronous>, transform_indices = @transform_2, window_bounds = array<i64: 32, 32>}, {pipeline_mode = #tpu.pipeline_mode<synchronous>, transform_indices = @transform_3, window_bounds = array<i64: 1, 32>}, {transform_indices = @transform_4, window_bounds = array<i64: 8, 8>}, {transform_indices = @transform_5, window_bounds = array<i64: 8, 8>}]} {
    %c0 = arith.constant 0 : index
    %c0_0 = arith.constant 0 : index
    %c0_1 = arith.constant 0 : index
    %0 = vector.load %arg3[%c0, %c0_0, %c0_1] : memref<8x8x32xf32, #tpu.memory_space<vmem>>, vector<8x8x32xf32>
    %1 = vector.shape_cast %0 : vector<8x8x32xf32> to vector<64x32xf32>
    %2 = arith.truncf %1 : vector<64x32xf32> to vector<64x32xbf16>
    %c0_2 = arith.constant 0 : index
    %c0_3 = arith.constant 0 : index
    %3 = vector.load %arg4[%c0_2, %c0_3] : memref<32x32xbf16, #tpu.memory_space<vmem>>, vector<32x32xbf16>
    %cst = arith.constant dense<0.000000e+00> : vector<64x32xf32>
    %4 = tpu.matmul %2, %3, %cst {dimension_numbers = #tpu.dot_dimension_numbers<[1], [0], [0], [1], [0, 0, 1, 1], [], []>} : vector<64x32xbf16>, vector<32x32xbf16>, vector<64x32xf32> -> vector<64x32xf32>
    %5 = vector.shape_cast %4 : vector<64x32xf32> to vector<8x8x32xf32>
    %c0_4 = arith.constant 0 : index
    %c0_5 = arith.constant 0 : index
    %6 = vector.load %arg2[%c0_4, %c0_5] : memref<8x32xf32, #tpu.memory_space<vmem>>, vector<8x32xf32>
    %7 = vector.shape_cast %6 : vector<8x32xf32> to vector<1x8x32xf32>
    %8 = vector.broadcast %7 : vector<1x8x32xf32> to vector<8x8x32xf32>
    %9 = arith.addf %5, %8 : vector<8x8x32xf32>
    %10 = math.tanh %9 : vector<8x8x32xf32>
    %c0_6 = arith.constant 0 : index
    %c0_7 = arith.constant 0 : index
    %11 = vector.load %arg5[%c0_6, %c0_7] : memref<1x32xf32, #tpu.memory_space<vmem>>, vector<1x32xf32>
    %12 = vector.shape_cast %11 : vector<1x32xf32> to vector<1x1x32xf32>
    %13 = vector.broadcast %12 : vector<1x1x32xf32> to vector<8x8x32xf32>
    %14 = arith.mulf %10, %13 : vector<8x8x32xf32>
    %cst_8 = arith.constant dense<0.000000e+00> : vector<8x8xf32>
    %15 = vector.multi_reduction <add>, %14, %cst_8 [2] : vector<8x8x32xf32> to vector<8x8xf32>
    %16 = tpu.transpose %15, [1, 0] : vector<8x8xf32> -> vector<8x8xf32>
    %c0_9 = arith.constant 0 : index
    %c0_10 = arith.constant 0 : index
    %17 = vector.load %arg6[%c0_9, %c0_10] : memref<8x8xf32, #tpu.memory_space<vmem>>, vector<8x8xf32>
    %cst_11 = arith.constant 0.000000e+00 : f32
    %18 = vector.broadcast %cst_11 : f32 to vector<8x8xf32>
    %19 = arith.cmpf oeq, %17, %18 : vector<8x8xf32>
    %cst_12 = arith.constant -1.000000e+06 : f32
    %20 = vector.broadcast %cst_12 : f32 to vector<8x8xf32>
    %21 = arith.select %19, %20, %16 : vector<8x8xi1>, vector<8x8xf32>
    %cst_13 = arith.constant dense<0xFF800000> : vector<8xf32>
    %22 = vector.multi_reduction <maximumf>, %21, %cst_13 [1] : vector<8x8xf32> to vector<8xf32>
    %23 = vector.shape_cast %22 : vector<8xf32> to vector<8x1xf32>
    %24 = vector.broadcast %23 : vector<8x1xf32> to vector<8x8xf32>
    %25 = arith.subf %21, %24 : vector<8x8xf32>
    %26 = math.exp %25 : vector<8x8xf32>
    %cst_14 = arith.constant dense<0.000000e+00> : vector<8xf32>
    %27 = vector.multi_reduction <add>, %26, %cst_14 [1] : vector<8x8xf32> to vector<8xf32>
    %28 = vector.shape_cast %27 : vector<8xf32> to vector<8x1xf32>
    %29 = tpu.reciprocal %28 {approx = true} : vector<8x1xf32> -> vector<8x1xf32>
    %30 = vector.broadcast %29 : vector<8x1xf32> to vector<8x8xf32>
    %31 = arith.mulf %26, %30 : vector<8x8xf32>
    %c0_15 = arith.constant 0 : index
    %c0_16 = arith.constant 0 : index
    %32 = vector.load %arg7[%c0_15, %c0_16] : memref<8x8xf32, #tpu.memory_space<vmem>>, vector<8x8xf32>
    tpu.vector_store %arg7[%c0_15, %c0_16], %31 {strides = array<i32>} : memref<8x8xf32, #tpu.memory_space<vmem>>, vector<8x8xf32>,
    return
  }
  func.func @transform_0(%arg0: i32, %arg1: i32) -> (i32, i32) {
    %c0_i32 = arith.constant 0 : i32
    %c0_i32_0 = arith.constant 0 : i32
    return %arg0, %c0_i32 : i32, i32
  }
  func.func @transform_1(%arg0: i32, %arg1: i32) -> (i32, i32, i32) {
    %c0_i32 = arith.constant 0 : i32
    %c0_i32_0 = arith.constant 0 : i32
    return %arg1, %arg0, %c0_i32 : i32, i32, i32
  }
  func.func @transform_2(%arg0: i32, %arg1: i32) -> (i32, i32) {
    %c0_i32 = arith.constant 0 : i32
    %c0_i32_0 = arith.constant 0 : i32
    %c0_i32_1 = arith.constant 0 : i32
    return %c0_i32, %c0_i32_0 : i32, i32
  }
  func.func @transform_3(%arg0: i32, %arg1: i32) -> (i32, i32) {
    %c0_i32 = arith.constant 0 : i32
    %c0_i32_0 = arith.constant 0 : i32
    %c0_i32_1 = arith.constant 0 : i32
    return %c0_i32, %c0_i32_0 : i32, i32
  }
  func.func @transform_4(%arg0: i32, %arg1: i32) -> (i32, i32) {
    %c0_i32 = arith.constant 0 : i32
    %c0_i32_0 = arith.constant 0 : i32
    return %arg0, %c0_i32 : i32, i32
  }
  func.func @transform_5(%arg0: i32, %arg1: i32) -> (i32, i32) {
    %c0_i32 = arith.constant 0 : i32
    %c0_i32_0 = arith.constant 0 : i32
    return %arg0, %c0_i32 : i32, i32
  }
}

</mosaic_0001>

<llo_original>
// kernel: tpu_custom_call.1
$region0: #{tpu_custom_call.1}
  #allocation0 [shape = 'u32[]', space=smem, size = 0x4, offset = 0x4, fixed_abs, tag = 'smem constant byte address 0x4 - core index']
  #allocation1 [shape = 'u32[144,128]{1,0:T(1,128)}', space=vmem, size = 0x12000, scoped, tag = 'internal scratch']
  %s0 = inlined_call_operand.vmem [shape: f32[16,32], index: 0, kind: input, shape index: {}]
  %s1 = inlined_call_operand.hbm [shape: f32[8,16,32], index: 1, kind: input, shape index: {}]
  %s2 = inlined_call_operand.hbm [shape: bf16[32,32], index: 2, kind: input, shape index: {}]
  %s3 = inlined_call_operand.vmem [shape: f32[1,32], index: 3, kind: input, shape index: {}]
  %s4 = inlined_call_operand.vmem [shape: f32[16,8], index: 4, kind: input, shape index: {}]
  %s5 = inlined_call_operand.vmem [shape: f32[16,8], index: 5, kind: output, shape index: {}]
  %s6 = sld [smem:[#allocation0]]
  $region61: #{tpu_custom_call.1} parent=0
    _
  %s8 = ssub.s32 1, %s6
  %s9 = scalar_select 0, %s8, %s6
  $region1: #{tpu_custom_call.1} parent=0
    #allocation2 [shape = 'u8[65536]{0}', space=vmem, size = 0x10000, scoped, tag = 'input window, operand 1']
    #allocation3 [shape = 's32[2]{0}', space=sflag, size = 0x8, scoped, tag = 'scoped memory for tpu_custom_call.1']
    #allocation4 [shape = 'u8[8192]{0}', space=vmem, size = 0x2000, scoped, tag = 'input window, operand 2, single buffered']
    #allocation5 [shape = 's32[1]{0}', space=sflag, size = 0x4, scoped, tag = 'scoped memory for tpu_custom_call.1']
    %10 = vsyncpa [#allocation3], 0
    %s11 = scalar_lea.sflag [#allocation3], 1
    %12 = vsyncpa %s11, 0
    %13 = vsyncpa [#allocation5], 0
    loop: start=0, step=1, limit=4
    $region2: #{tpu_custom_call.1} parent=1 // loop_pre_header
      _
    $region3: #{tpu_custom_call.1} parent=1 // loop_header
      %s15 = sphi 0, %s19
      %p16 = scmp.ge.s32.totalorder %s15, 4
      %s22 = sphi 0, %s34
      %s23 = sphi 0, %s30
      %s24 = sphi 0, %s22
      %s25 = sphi 0, %s23
      %s26 = sphi 0, %s24
      %s27 = sphi 0, %s25
      %s37 = sphi 0, %s39
      %s40 = sphi 0, %s37
      %s41 = sphi 0, %s40
      %s57 = sphi 0, %s41
      %s65 = sphi 0, %s67
      %s68 = sphi 0, %s65
      %s69 = sphi 0, %s68
      %s85 = sphi 0, %s69
      %s89 = sphi 0, %s89
      %s91 = sphi 0, %s89
      %s92 = sphi 0, %s91
      %s106 = sphi 0, %s92
      %s110 = sphi 0, %s110
      %s112 = sphi 0, %s110
      %s113 = sphi 0, %s112
      %s127 = sphi 0, %s113
      %s133 = sphi 0, %s135
      %s136 = sphi 0, %s133
      %s137 = sphi 0, %s136
      %s153 = sphi 0, %s137
      %s159 = sphi 0, %s161
      %s162 = sphi 0, %s159
      %s163 = sphi 0, %s162
      %s179 = sphi 0, %s163
    $region4: #{tpu_custom_call.1} parent=1 // loop_header_branch
      %18 = sbr.rel (%p16) target = $region8
    $region5: #{tpu_custom_call.1} parent=1 // loop_body
      %s20 = ssub.s32 %s15, 1
      %s21 = ssub.s32 %s15, 2
      %s28 = sadd.s32 1, %s23
      %p29 = scmp.ge.s32.totalorder %s28, 1
      %s30 = scalar_select %p29, 0, %s28
      %s31 = sadd.s32 1, %s22
      %s32 = scalar_select %p29, %s31, %s22
      %p33 = scmp.ge.s32.totalorder %s32, 2
      %s34 = scalar_select %p33, 0, %s32
      %s35 = ssub.s32 %s22, %s34
      %p36 = scmp.eq.s32.totalorder %s35, 0
      %s38 = sadd.s32 %s37, 1
      %s39 = scalar_select %p36, %s37, %s38
      %p42 = pneg %p36
      %p43 = scmp.eq.s32.totalorder %s15, 1
      %p44 = por %p42, %p43
      %p45 = scmp.ne.s32.totalorder %s37, %s40
      %p46 = scmp.eq.s32.totalorder %s15, 0
      %p47 = por %p45, %p46
      %p48 = scmp.ne.s32.totalorder %s37, %s40
      %p49 = scmp.eq.s32.totalorder %s20, 1
      %p50 = por %p48, %p49
      %p51 = scmp.ne.s32.totalorder %s40, %s41
      %p52 = scmp.eq.s32.totalorder %s20, 0
      %p53 = por %p51, %p52
      %p54 = scmp.ne.s32.totalorder %s40, %s41
      %p55 = scmp.eq.s32.totalorder %s21, 1
      %p56 = por %p54, %p55
      %p58 = scmp.ne.s32.totalorder %s41, %s57
      %p59 = scmp.eq.s32.totalorder %s21, 0
      %p60 = por %p58, %p59
      %s61 = ssub.s32 %s23, %s30
      %s62 = ssub.s32 %s22, %s34
      %s63 = sor.u32 %s61, %s62
      %p64 = scmp.eq.s32.totalorder %s63, 0
      %s66 = sadd.s32 %s65, 1
      %s67 = scalar_select %p64, %s65, %s66
      %p70 = pneg %p64
      %p71 = scmp.eq.s32.totalorder %s15, 1
      %p72 = por %p70, %p71
      %p73 = scmp.ne.s32.totalorder %s65, %s68
      %p74 = scmp.eq.s32.totalorder %s15, 0
      %p75 = por %p73, %p74
      %p76 = scmp.ne.s32.totalorder %s65, %s68
      %p77 = scmp.eq.s32.totalorder %s20, 1
      %p78 = por %p76, %p77
      %p79 = scmp.ne.s32.totalorder %s68, %s69
      %p80 = scmp.eq.s32.totalorder %s20, 0
      %p81 = por %p79, %p80
      %p82 = scmp.ne.s32.totalorder %s68, %s69
      %p83 = scmp.eq.s32.totalorder %s21, 1
      %p84 = por %p82, %p83
      %p86 = scmp.ne.s32.totalorder %s69, %s85
      %p87 = scmp.eq.s32.totalorder %s21, 0
      %p88 = por %p86, %p87
      %s90 = sadd.s32 %s89, 1
      %p93 = scmp.eq.s32.totalorder %s15, 1
      %p94 = scmp.ne.s32.totalorder %s89, %s91
      %p95 = scmp.eq.s32.totalorder %s15, 0
      %p96 = por %p94, %p95
      %p97 = scmp.ne.s32.totalorder %s89, %s91
      %p98 = scmp.eq.s32.totalorder %s20, 1
      %p99 = por %p97, %p98
      %p100 = scmp.ne.s32.totalorder %s91, %s92
      %p101 = scmp.eq.s32.totalorder %s20, 0
      %p102 = por %p100, %p101
      %p103 = scmp.ne.s32.totalorder %s91, %s92
      %p104 = scmp.eq.s32.totalorder %s21, 1
      %p105 = por %p103, %p104
      %p107 = scmp.ne.s32.totalorder %s92, %s106
      %p108 = scmp.eq.s32.totalorder %s21, 0
      %p109 = por %p107, %p108
      %s111 = sadd.s32 %s110, 1
      %p114 = scmp.eq.s32.totalorder %s15, 1
      %p115 = scmp.ne.s32.totalorder %s110, %s112
      %p116 = scmp.eq.s32.totalorder %s15, 0
      %p117 = por %p115, %p116
      %p118 = scmp.ne.s32.totalorder %s110, %s112
      %p119 = scmp.eq.s32.totalorder %s20, 1
      %p120 = por %p118, %p119
      %p121 = scmp.ne.s32.totalorder %s112, %s113
      %p122 = scmp.eq.s32.totalorder %s20, 0
      %p123 = por %p121, %p122
      %p124 = scmp.ne.s32.totalorder %s112, %s113
      %p125 = scmp.eq.s32.totalorder %s21, 1
      %p126 = por %p124, %p125
      %p128 = scmp.ne.s32.totalorder %s113, %s127
      %p129 = scmp.eq.s32.totalorder %s21, 0
      %p130 = por %p128, %p129
      %s131 = ssub.s32 %s22, %s34
      %p132 = scmp.eq.s32.totalorder %s131, 0
      %s134 = sadd.s32 %s133, 1
      %s135 = scalar_select %p132, %s133, %s134
      %p138 = pneg %p132
      %p139 = scmp.eq.s32.totalorder %s15, 1
      %p140 = por %p138, %p139
      %p141 = scmp.ne.s32.totalorder %s133, %s136
      %p142 = scmp.eq.s32.totalorder %s15, 0
      %p143 = por %p141, %p142
      %p144 = scmp.ne.s32.totalorder %s133, %s136
      %p145 = scmp.eq.s32.totalorder %s20, 1
      %p146 = por %p144, %p145
      %p147 = scmp.ne.s32.totalorder %s136, %s137
      %p148 = scmp.eq.s32.totalorder %s20, 0
      %p149 = por %p147, %p148
      %p150 = scmp.ne.s32.totalorder %s136, %s137
      %p151 = scmp.eq.s32.totalorder %s21, 1
      %p152 = por %p150, %p151
      %p154 = scmp.ne.s32.totalorder %s137, %s153
      %p155 = scmp.eq.s32.totalorder %s21, 0
      %p156 = por %p154, %p155
      %s157 = ssub.s32 %s22, %s34
      %p158 = scmp.eq.s32.totalorder %s157, 0
      %s160 = sadd.s32 %s159, 1
      %s161 = scalar_select %p158, %s159, %s160
      %p164 = pneg %p158
      %p165 = scmp.eq.s32.totalorder %s15, 1
      %p166 = por %p164, %p165
      %p167 = scmp.ne.s32.totalorder %s159, %s162
      %p168 = scmp.eq.s32.totalorder %s15, 0
      %p169 = por %p167, %p168
      %p170 = scmp.ne.s32.totalorder %s159, %s162
      %p171 = scmp.eq.s32.totalorder %s20, 1
      %p172 = por %p170, %p171
      %p173 = scmp.ne.s32.totalorder %s162, %s163
      %p174 = scmp.eq.s32.totalorder %s20, 0
      %p175 = por %p173, %p174
      %p176 = scmp.ne.s32.totalorder %s162, %s163
      %p177 = scmp.eq.s32.totalorder %s21, 1
      %p178 = por %p176, %p177
      %p180 = scmp.ne.s32.totalorder %s163, %s179
      %p181 = scmp.eq.s32.totalorder %s21, 0
      %p182 = por %p180, %p181
      %p183 = scmp.le.s32.totalorder 1, %s15
      %p184 = scmp.lt.s32.totalorder %s15, 3
      %p185 = pnand %p183, %p184
      %p186 = pneg %p185
      // Predicated region
      $region9: #{tpu_custom_call.1} parent=5 // pred_check
        _
      $region10: #{tpu_custom_call.1} parent=5 // pred_check_branch
        %188 = sbr.rel (%p185) target = $region12
      $region11: #{tpu_custom_call.1} parent=5 // pred_region
        %s189 = ssub.s32 %s15, 1
        // Predicated region
        $region13: #{tpu_custom_call.1} parent=11 // pred_check
          %p190 = pneg %p102
        $region14: #{tpu_custom_call.1} parent=11 // pred_check_branch
          %192 = sbr.rel (%p190) target = $region16
        $region15: #{tpu_custom_call.1} parent=11 // pred_region
          %s194 = ssub.s32 256, 256
          %195 = vsyncadd [#allocation5], %s194
          %s196 = sshll.u32 [#allocation4], 4
          %s197 = int_to_ptr.vmem [resolvable:$true] %s196
          %202 = dma.hbm_to_vmem [thread:$0]  %s2, 256, %s197, [#allocation5], 64, 64, 4
        $region16: #{tpu_custom_call.1} parent=11 // pred_fallthru
          _
        // Predicated region
        $region17: #{tpu_custom_call.1} parent=11 // pred_check
          %p203 = pneg %p123
        $region18: #{tpu_custom_call.1} parent=11 // pred_check_branch
          %205 = sbr.rel (%p203) target = $region20
        $region19: #{tpu_custom_call.1} parent=11 // pred_region
          _
        $region20: #{tpu_custom_call.1} parent=11 // pred_fallthru
          _
      $region12: #{tpu_custom_call.1} parent=5 // pred_fallthru
        _
      %p206 = scmp.lt.s32.totalorder %s15, 2
      // Predicated region
      $region21: #{tpu_custom_call.1} parent=5 // pred_check
        %p207 = pneg %p206
      $region22: #{tpu_custom_call.1} parent=5 // pred_check_branch
        %209 = sbr.rel (%p207) target = $region24
      $region23: #{tpu_custom_call.1} parent=5 // pred_region
        // Predicated region
        $region25: #{tpu_custom_call.1} parent=23 // pred_check
          %p210 = pneg %p47
        $region26: #{tpu_custom_call.1} parent=23 // pred_check_branch
          %212 = sbr.rel (%p210) target = $region28
        $region27: #{tpu_custom_call.1} parent=23 // pred_region
          %p213 = scmp.lt.s32.totalorder %s22, 1
          %s214 = scalar_select %p213, %s22, 1
          %s215 = smul.addr %s214, 8
          %s216 = scalar_lea.vmem %s0, %s215
        $region28: #{tpu_custom_call.1} parent=23 // pred_fallthru
          _
        // Predicated region
        $region29: #{tpu_custom_call.1} parent=23 // pred_check
          %p217 = pneg %p75
        $region30: #{tpu_custom_call.1} parent=23 // pred_check_branch
          %219 = sbr.rel (%p217) target = $region32
        $region31: #{tpu_custom_call.1} parent=23 // pred_region
          %s220 = sand.u32 %s65, 1
          %s221 = scalar_lea.sflag [#allocation3], %s220
          %s222 = sand.u32 %s65, 1
          %s223 = smul.addr %s222, 64
          %s224 = scalar_lea.vmem [#allocation2], %s223
          %s225 = smul.u32 8, %s23
          %s227 = ssub.s32 1024, 1024
          %228 = vsyncadd %s221, %s227
          %s229 = smul.addr %s225, 2
          %s230 = sadd.s32 %s22, %s229
          %s231 = smul.addr %s230, 128
          %s232 = scalar_lea.hbm %s1, %s231
          %s233 = sshll.u32 %s224, 4
          %s234 = int_to_ptr.vmem [resolvable:$true] %s233
          %239 = dma.hbm_to_vmem [thread:$0]  %s232, 1024, %s234, %s221, 256, 128, 8
        $region32: #{tpu_custom_call.1} parent=23 // pred_fallthru
          _
        // Predicated region
        $region33: #{tpu_custom_call.1} parent=23 // pred_check
          %p240 = pneg %p143
        $region34: #{tpu_custom_call.1} parent=23 // pred_check_branch
          %242 = sbr.rel (%p240) target = $region36
        $region35: #{tpu_custom_call.1} parent=23 // pred_region
          %p243 = scmp.lt.s32.totalorder %s22, 1
          %s244 = scalar_select %p243, %s22, 1
          %s245 = smul.addr %s244, 8
          %s246 = scalar_lea.vmem %s4, %s245
        $region36: #{tpu_custom_call.1} parent=23 // pred_fallthru
          _
      $region24: #{tpu_custom_call.1} parent=5 // pred_fallthru
        _
      %p247 = scmp.le.s32.totalorder 1, %s15
      %p248 = scmp.lt.s32.totalorder %s15, 3
      %p249 = pnand %p247, %p248
      %p250 = pneg %p249
      // Predicated region
      $region37: #{tpu_custom_call.1} parent=5 // pred_check
        _
      $region38: #{tpu_custom_call.1} parent=5 // pred_check_branch
        %252 = sbr.rel (%p249) target = $region40
      $region39: #{tpu_custom_call.1} parent=5 // pred_region
        %s253 = ssub.s32 %s15, 1
        %s254 = sand.u32 %s68, 1
        %s255 = scalar_lea.sflag [#allocation3], %s254
        %s256 = sand.u32 %s68, 1
        %s257 = smul.addr %s256, 64
        %s258 = scalar_lea.vmem [#allocation2], %s257
        // Predicated region
        $region41: #{tpu_custom_call.1} parent=39 // pred_check
          %p259 = pneg %p81
        $region42: #{tpu_custom_call.1} parent=39 // pred_check_branch
          %261 = sbr.rel (%p259) target = $region44
        $region43: #{tpu_custom_call.1} parent=39 // pred_region
          %262 = dma.done %s255, 1024
        $region44: #{tpu_custom_call.1} parent=39 // pred_fallthru
          _
        // Predicated region
        $region45: #{tpu_custom_call.1} parent=39 // pred_check
          %p263 = pneg %p102
        $region46: #{tpu_custom_call.1} parent=39 // pred_check_branch
          %265 = sbr.rel (%p263) target = $region48
        $region47: #{tpu_custom_call.1} parent=39 // pred_region
          %266 = dma.done [#allocation5], 256
        $region48: #{tpu_custom_call.1} parent=39 // pred_fallthru
          _
        %p267 = scmp.lt.s32.totalorder %s24, 1
        %s268 = scalar_select %p267, %s24, 1
        %s269 = smul.addr %s268, 8
        %s270 = scalar_lea.vmem %s0, %s269
        %p271 = pneg %p53
        %p272 = pneg %p50
        %s273 = sand.u32 %s68, 1
        %s274 = scalar_lea.sflag [#allocation3], %s273
        %s275 = sand.u32 %s68, 1
        %s276 = smul.addr %s275, 64
        %s277 = scalar_lea.vmem [#allocation2], %s276
        %p278 = pneg %p81
        %p279 = pneg %p78
        %p280 = pneg %p102
        %p281 = pneg %p99
        %p282 = pneg %p123
        %p283 = pneg %p120
        %p284 = scmp.lt.s32.totalorder %s24, 1
        %s285 = scalar_select %p284, %s24, 1
        %s286 = smul.addr %s285, 8
        %s287 = scalar_lea.vmem %s4, %s286
        %p288 = pneg %p149
        %p289 = pneg %p146
        %p290 = pneg %p175
        %p291 = pneg %p172
        %p292 = scmp.lt.s32.totalorder %s24, 1
        %s293 = scalar_select %p292, %s24, 1
        %s294 = smul.addr %s293, 8
        %s295 = scalar_lea.vmem %s5, %s294
        %p296 = scmp.lt.s32.totalorder %s24, 1
        %s297 = scalar_select %p296, %s24, 1
        %s298 = smul.addr %s297, 8
        %s299 = scalar_lea.vmem %s0, %s298
        %s300 = smul.u32 8, %s25
        %p301 = scmp.lt.s32.totalorder %s24, 1
        %s302 = scalar_select %p301, %s24, 1
        %s303 = smul.addr %s302, 8
        %s304 = scalar_lea.vmem %s4, %s303
        %p305 = scmp.lt.s32.totalorder %s24, 1
        %s306 = scalar_select %p305, %s24, 1
        %s307 = smul.addr %s306, 8
        %s308 = scalar_lea.vmem %s5, %s307
        %v310 = vld [vmem:[%s258] sm:$0xff]
        %v311 = vld [vmem:[%s258 + $0x8] sm:$0xff]
        %v312 = vld [vmem:[%s258 + $0x10] sm:$0xff]
        %v313 = vld [vmem:[%s258 + $0x18] sm:$0xff]
        %v314 = vld [vmem:[%s258 + $0x20] sm:$0xff]
        %v315 = vld [vmem:[%s258 + $0x28] sm:$0xff]
        %v316 = vld [vmem:[%s258 + $0x30] sm:$0xff]
        %v317 = vld [vmem:[%s258 + $0x38] sm:$0xff]
        %v318 = vpack.c.bf16 %v311, %v310
        %v319 = vpack.c.bf16 %v313, %v312
        %v320 = vpack.c.bf16 %v315, %v314
        %v321 = vpack.c.bf16 %v317, %v316
        %v322 = vld [vmem:[#allocation4] sm:$0xf]
        %v323 = vld [vmem:[#allocation4 + $0x4] sm:$0xf]
        %v324 = vld [vmem:[#allocation4 + $0x8] sm:$0xf]
        %v325 = vld [vmem:[#allocation4 + $0xc] sm:$0xf]
        %v330 = vunpack.c.l.b16 %v322
        %v331 = vunpack.c.l.b16 %v323
        %v332 = vunpack.c.l.b16 %v324
        %v333 = vunpack.c.l.b16 %v325
        %v334 = vpack.c.b16 %v331, %v330
        %v335 = vpack.c.b16 %v333, %v332
        %vm338 = vcmask 261120
        %v340 = vsel %vm338, %v318, 0
        %v343 = vsel %vm338, %v319, 0
        %v346 = vsel %vm338, %v320, 0
        %v349 = vsel %vm338, %v321, 0
        %351 = vmatprep.subr.bf16.mxu0 0
        %352 = vmatpush1.bf16.msra.mxu0 0
        %353 = vmatprep.subr.bf16.mxu0 0
        %354 = vmatpush1.bf16.msra.mxu0 0
        %355 = vmatprep.subr.bf16.mxu0 0
        %356 = vmatpush1.bf16.msra.mxu0 0
        %357 = vmatprep.subr.bf16.mxu0 0
        %358 = vmatpush1.bf16.msra.mxu0 0
        %359 = vmatprep.subr.bf16.mxu0 0
        %360 = vmatpush1.bf16.msra.mxu0 0
        %361 = vmatprep.subr.bf16.mxu0 0
        %362 = vmatpush1.bf16.msra.mxu0 0
        %363 = vmatprep.subr.bf16.mxu0 0
        %364 = vmatpush1.bf16.msra.mxu0 %v335
        %365 = vmatprep.subr.bf16.mxu0 0
        %366 = vmatpush1.bf16.msra.mxu0 %v334
        %367 = vmatprep.subr.bf16.mxu0 0
        %368 = vmatpush2.bf16.msra.mxu0 0
        %369 = vmatprep.subr.bf16.mxu0 0
        %370 = vmatpush2.bf16.msra.mxu0 0
        %371 = vmatprep.subr.bf16.mxu0 0
        %372 = vmatpush2.bf16.msra.mxu0 0
        %373 = vmatprep.subr.bf16.mxu0 0
        %374 = vmatpush2.bf16.msra.mxu0 0
        %375 = vmatprep.subr.bf16.mxu0 0
        %376 = vmatpush2.bf16.msra.mxu0 0
        %377 = vmatprep.subr.bf16.mxu0 0
        %378 = vmatpush2.bf16.msra.mxu0 0
        %379 = vmatprep.subr.bf16.mxu0 0
        %380 = vmatpush2.bf16.msra.mxu0 0
        %381 = vmatprep.subr.bf16.mxu0 0
        %382 = vmatpush2.bf16.msra.mxu0 0
        %383 = vmatprep.mubr.bf16.mxu0 0
        %384 = vmatmul.mubr.bf16.gmra.mxu0 %v340
        %v385 = vpop.f32.mrf.mxu0
        %v386 = vadd.f32 0.0, %v385
        %v387 = vpop.f32.mrf.mxu0
        %v388 = vpop.f32.mrf.mxu0
        %v389 = vadd.f32 0.0, %v388
        %v390 = vpop.f32.mrf.mxu0
        %391 = vmatprep.mubr.bf16.mxu0 0
        %392 = vmatmul.mubr.bf16.gmra.mxu0 %v343
        %v393 = vpop.f32.mrf.mxu0
        %v394 = vadd.f32 0.0, %v393
        %v395 = vpop.f32.mrf.mxu0
        %v396 = vpop.f32.mrf.mxu0
        %v397 = vadd.f32 0.0, %v396
        %v398 = vpop.f32.mrf.mxu0
        %399 = vmatprep.mubr.bf16.mxu0 0
        %400 = vmatmul.mubr.bf16.gmra.mxu0 %v346
        %v401 = vpop.f32.mrf.mxu0
        %v402 = vadd.f32 0.0, %v401
        %v403 = vpop.f32.mrf.mxu0
        %v404 = vpop.f32.mrf.mxu0
        %v405 = vadd.f32 0.0, %v404
        %v406 = vpop.f32.mrf.mxu0
        %407 = vmatprep.mubr.bf16.mxu0 0
        %408 = vmatmul.mubr.bf16.gmra.mxu0 %v349
        %v409 = vpop.f32.mrf.mxu0
        %v410 = vadd.f32 0.0, %v409
        %v411 = vpop.f32.mrf.mxu0
        %v412 = vpop.f32.mrf.mxu0
        %v413 = vadd.f32 0.0, %v412
        %v414 = vpop.f32.mrf.mxu0
        %415 = vdwg.mxu0
        %v416 = vld [vmem:[%s299] sm:$0xff]
        %v417 = vadd.f32 %v386, %v416
        %v418 = vadd.f32 %v389, %v416
        %v419 = vadd.f32 %v394, %v416
        %v420 = vadd.f32 %v397, %v416
        %v421 = vadd.f32 %v402, %v416
        %v422 = vadd.f32 %v405, %v416
        %v423 = vadd.f32 %v410, %v416
        %v424 = vadd.f32 %v413, %v416
        %v425 = vtanh.pop %v417
        %v426 = vtanh.pop %v418
        %v427 = vtanh.pop %v419
        %v428 = vtanh.pop %v420
        %v429 = vtanh.pop %v421
        %v430 = vtanh.pop %v422
        %v431 = vtanh.pop %v423
        %v432 = vtanh.pop %v424
        %v433 = vld [vmem:[%s3] sm:$0x1]
        %v435 = vlaneseq
        %v436 = vshrl.u32 %v435, 7
        %v437 = vsub.s32 0, %v436
        %v438 = vrot.slane %v433, %v437
        %v440 = vmul.f32 %v425, %v438
        %v441 = vmul.f32 %v426, %v438
        %v442 = vmul.f32 %v427, %v438
        %v443 = vmul.f32 %v428, %v438
        %v444 = vmul.f32 %v429, %v438
        %v445 = vmul.f32 %v430, %v438
        %v446 = vmul.f32 %v431, %v438
        %v447 = vmul.f32 %v432, %v438
        %v448 = vsel %vm338, %v440, 0.0
        %449 = vadd.xlane.f32.xlu0 %v448
        %v450 = vpop.xlane.xlu0 %449
        %v451 = vsel %vm338, %v441, 0.0
        %452 = vadd.xlane.f32.xlu0 %v451
        %v453 = vpop.xlane.xlu0 %452
        %v454 = vsel %vm338, %v442, 0.0
        %455 = vadd.xlane.f32.xlu0 %v454
        %v456 = vpop.xlane.xlu0 %455
        %v457 = vsel %vm338, %v443, 0.0
        %458 = vadd.xlane.f32.xlu0 %v457
        %v459 = vpop.xlane.xlu0 %458
        %v460 = vsel %vm338, %v444, 0.0
        %461 = vadd.xlane.f32.xlu0 %v460
        %v462 = vpop.xlane.xlu0 %461
        %v463 = vsel %vm338, %v445, 0.0
        %464 = vadd.xlane.f32.xlu0 %v463
        %v465 = vpop.xlane.xlu0 %464
        %v466 = vsel %vm338, %v446, 0.0
        %467 = vadd.xlane.f32.xlu0 %v466
        %v468 = vpop.xlane.xlu0 %467
        %v469 = vsel %vm338, %v447, 0.0
        %470 = vadd.xlane.f32.xlu0 %v469
        %v471 = vpop.xlane.xlu0 %470
        %v480 = vlaneseq
        %v481 = vand.u32 %v480, 127
        %v482 = vlaneseq
        %v483 = vshrl.u32 %v482, 7
        %v484 = vsub.s32 %v481, %v483
        %v485 = vrot.slane %v450, %v484
        %v486 = vlaneseq
        %v487 = vshrl.u32 %v486, 7
        %v488 = vsub.s32 %v481, %v487
        %v489 = vrot.slane %v453, %v488
        %v490 = vlaneseq
        %v491 = vshrl.u32 %v490, 7
        %v492 = vsub.s32 %v481, %v491
        %v493 = vrot.slane %v456, %v492
        %v494 = vlaneseq
        %v495 = vshrl.u32 %v494, 7
        %v496 = vsub.s32 %v481, %v495
        %v497 = vrot.slane %v459, %v496
        %v498 = vlaneseq
        %v499 = vshrl.u32 %v498, 7
        %v500 = vsub.s32 %v481, %v499
        %v501 = vrot.slane %v462, %v500
        %v502 = vlaneseq
        %v503 = vshrl.u32 %v502, 7
        %v504 = vsub.s32 %v481, %v503
        %v505 = vrot.slane %v465, %v504
        %v506 = vlaneseq
        %v507 = vshrl.u32 %v506, 7
        %v508 = vsub.s32 %v481, %v507
        %v509 = vrot.slane %v468, %v508
        %v510 = vlaneseq
        %v511 = vshrl.u32 %v510, 7
        %v512 = vsub.s32 %v481, %v511
        %v513 = vrot.slane %v471, %v512
        %vm514 = vcmask 1041409
        %v515 = vsel %vm514, %v489, %v485
        %vm516 = vcmask 1042434
        %v517 = vsel %vm516, %v493, %v515
        %vm518 = vcmask 1043459
        %v519 = vsel %vm518, %v497, %v517
        %vm520 = vcmask 1044484
        %v521 = vsel %vm520, %v501, %v519
        %vm522 = vcmask 1045509
        %v523 = vsel %vm522, %v505, %v521
        %vm524 = vcmask 1046534
        %v525 = vsel %vm524, %v509, %v523
        %vm526 = vcmask 1047559
        %v527 = vsel %vm526, %v513, %v525
        %529 = vxpose.xlu0.b32.start [1/16] %v527, 128
        %530 = vxpose.xlu0.b32.cont [2/16] 0.0, 128
        %531 = vxpose.xlu0.b32.cont [3/16] 0.0, 128
        %532 = vxpose.xlu0.b32.cont [4/16] 0.0, 128
        %533 = vxpose.xlu0.b32.cont [5/16] 0.0, 128
        %534 = vxpose.xlu0.b32.cont [6/16] 0.0, 128
        %535 = vxpose.xlu0.b32.cont [7/16] 0.0, 128
        %536 = vxpose.xlu0.b32.cont [8/16] 0.0, 128
        %537 = vxpose.xlu0.b32.cont [9/16] 0.0, 128
        %538 = vxpose.xlu0.b32.cont [10/16] 0.0, 128
        %539 = vxpose.xlu0.b32.cont [11/16] 0.0, 128
        %540 = vxpose.xlu0.b32.cont [12/16] 0.0, 128
        %541 = vxpose.xlu0.b32.cont [13/16] 0.0, 128
        %542 = vxpose.xlu0.b32.cont [14/16] 0.0, 128
        %543 = vxpose.xlu0.b32.cont [15/16] 0.0, 128
        %544 = vxpose.xlu0.b32.end [16/16] 0.0, 128
        %v545 = vpop.trf.xlu0
        %v546 = vpop.trf.xlu0
        %v547 = vpop.trf.xlu0
        %v548 = vpop.trf.xlu0
        %v549 = vpop.trf.xlu0
        %v550 = vpop.trf.xlu0
        %v551 = vpop.trf.xlu0
        %v552 = vpop.trf.xlu0
        %v553 = vpop.trf.xlu0
        %v554 = vpop.trf.xlu0
        %v555 = vpop.trf.xlu0
        %v556 = vpop.trf.xlu0
        %v557 = vpop.trf.xlu0
        %v558 = vpop.trf.xlu0
        %v559 = vpop.trf.xlu0
        %v560 = vpop.trf.xlu0
        %v561 = vld [vmem:[%s304] sm:$0xff]
        %vm562 = vcmp.eq.f32.partialorder %v561, 0.0
        %v563 = vsel %vm562, -1000000.0, %v545
        %vm564 = vcmask 64512
        %v565 = vsel %vm564, %v563, -inf
        %566 = vmax.xlane.f32.xlu0 %v565
        %v567 = vpop.xlane.xlu0 %566
        %v568 = vsub.f32 %v563, %v567
        %v569 = vmul.f32 %v568, 1.442695
        %v570 = vpow.pop %v569
        %v571 = vsel %vm564, %v570, 0.0
        %572 = vadd.xlane.f32.xlu0 %v571
        %v573 = vpop.xlane.xlu0 %572
        %v574 = vrcp.pop %v573
        %v575 = vmul.f32 %v570, %v574
        %576 = vst.msk [vmem:[%s308] sm:$0xff] %vm564, %v575
        %p577 = scmp.lt.s32.totalorder %s24, 1
        %s578 = scalar_select %p577, %s24, 1
        %s579 = smul.addr %s578, 8
        %s580 = scalar_lea.vmem %s5, %s579
        // Predicated region
        $region49: #{tpu_custom_call.1} parent=39 // pred_check
          %p581 = pneg %p172
        $region50: #{tpu_custom_call.1} parent=39 // pred_check_branch
          %583 = sbr.rel (%p581) target = $region52
        $region51: #{tpu_custom_call.1} parent=39 // pred_region
          _
        $region52: #{tpu_custom_call.1} parent=39 // pred_fallthru
          _
      $region40: #{tpu_custom_call.1} parent=5 // pred_fallthru
        _
      %p584 = scmp.le.s32.totalorder 2, %s15
      // Predicated region
      $region53: #{tpu_custom_call.1} parent=5 // pred_check
        %p585 = pneg %p584
      $region54: #{tpu_custom_call.1} parent=5 // pred_check_branch
        %587 = sbr.rel (%p585) target = $region56
      $region55: #{tpu_custom_call.1} parent=5 // pred_region
        %s588 = ssub.s32 %s15, 2
        // Predicated region
        $region57: #{tpu_custom_call.1} parent=55 // pred_check
          %p589 = pneg %p178
        $region58: #{tpu_custom_call.1} parent=55 // pred_check_branch
          %591 = sbr.rel (%p589) target = $region60
        $region59: #{tpu_custom_call.1} parent=55 // pred_region
          %p592 = scmp.lt.s32.totalorder %s26, 1
          %s593 = scalar_select %p592, %s26, 1
          %s594 = smul.addr %s593, 8
          %s595 = scalar_lea.vmem %s5, %s594
        $region60: #{tpu_custom_call.1} parent=55 // pred_fallthru
          _
      $region56: #{tpu_custom_call.1} parent=5 // pred_fallthru
        _
    $region6: #{tpu_custom_call.1} parent=1 // loop_footer
      %s19 = sadd.s32 1, %s15
    $region7: #{tpu_custom_call.1} parent=1 // loop_footer_branch
      %14 = sbr.rel target = $region3
    $region8: #{tpu_custom_call.1} parent=1 // loop_exit
      _
    %596 = vsyncpa [#allocation3], 1
    %s597 = scalar_lea.sflag [#allocation3], 1
    %598 = vsyncpa %s597, 1
    %599 = vsyncpa [#allocation5], 1

</llo_original>
